<compile_context>
chip_gen: v5e
topology: v5e:2x2
jax: 0.10.0
libtpu: 0.0.40
codegen_flags: <defaults>
</compile_context>

<pallas_src>
import jax
import jax.numpy as jnp
import numpy as np
from jax.experimental import pallas as pl
from jax.experimental.pallas import tpu as pltpu

SUBLANES = 8                 # sublane rows per graph (fills the 8-deep sublane axis)
LANE_GROUP = 128             # vreg lane width / lane granularity
TARGET_TILE_BYTES = 2 << 20  # aim for >= ~2 MiB of input per grid step


# ----------------------------- helpers (glue) -----------------------------
def softplus(x):
    return jnp.logaddexp(x, 0.0)


def softplus_inverse(x):
    # log(exp(x) - 1), numerically stable
    x = jnp.asarray(x, jnp.float32)
    return x + jnp.log(-jnp.expm1(-x))


def _round_up(x, m):
    return ((x + m - 1) // m) * m


def _choose_lane_tile(w_min, g8, target_tile_bytes):
    # bytes per grid step = 3 channels * g8 rows * lane_tile lanes * 4 B
    budget_lanes = max(LANE_GROUP, target_tile_bytes // (3 * g8 * 4))
    budget_lanes = (budget_lanes // LANE_GROUP) * LANE_GROUP
    return int(min(w_min, budget_lanes))


# ------------------------------- Pallas kernel ----------------------------
def _zbl_kernel(params_ref, edges_ref, out_ref):
    """params_ref (SMEM, f32[9]):
       [0]=1/r_cut  [1:5]=softplus(exponents)  [5:9]=L1-normalized softplus(coeffs)

    edges_ref: (1, 3, G*8, lane_tile) fused edge tile (one contiguous DMA):
      channel 0: a_ij = (z_i**a_pow + z_j**a_pow) * a_div   (hoisted per-node)
      channel 1: r_ij
      channel 2: z_i * z_j / r_ij                            (1/r folded in wrapper)
    Padded edges carry zz/r = 0 (and r = 2*r_cut), so no mask and no NaN/Inf.

    out_ref: (G*8, 128) resident partial-sum accumulator (one per core block).
    """
    @pl.when(pl.program_id(1) == 0)
    def _():
        out_ref[...] = jnp.zeros_like(out_ref)

    a_ij = edges_ref[0, 0, :, :]
    r = edges_ref[0, 1, :, :]
    zzr = edges_ref[0, 2, :, :]

    # screening = sum_k c_k * exp(-(a_ij * e_k) * r)   (4 EUP exps per edge)
    ar = a_ij * r
    screening = params_ref[5] * jnp.exp(-params_ref[1] * ar)
    for k in range(1, 4):
        screening = screening + params_ref[5 + k] * jnp.exp(-params_ref[1 + k] * ar)

    # polynomial_cutoff envelope 1 - 10x^3 + 15x^4 - 6x^5, x = r / r_cut (Horner)
    x = r * params_ref[0]
    env = 1.0 + x * x * x * (-10.0 + x * (15.0 - 6.0 * x))
    env = jnp.where(x <= 1.0, env, 0.0)

    e = zzr * env * screening                      # per-edge repulsion / (0.5*ke)

    # Fold the lane axis into one 128-lane group (static slice adds on the VALU)
    # so the resident accumulator / writeback is only (G*8, 128).
    lane_tile = e.shape[-1]
    acc = e[:, 0:LANE_GROUP]
    for t in range(1, lane_tile // LANE_GROUP):
        acc = acc + e[:, t * LANE_GROUP:(t + 1) * LANE_GROUP]

    out_ref[...] += acc


# ------------------------------ host-side packing ---------------------------
def pack_edges(a_ij_list, r_list, zzr_list, *, r_pad, ncores=1,
               target_tile_bytes=TARGET_TILE_BYTES):
    """Pack per-graph edge channels into a fused (num_tiles, 3, G*8, lane_tile)
    slab where every [t] tile is contiguous in HBM.  Capacity is derived from
    the actual max edge count (no fixed giant E_CAP)."""
    num_graphs = len(a_ij_list)
    g8 = num_graphs * SUBLANES
    max_e = max(int(a.shape[0]) for a in a_ij_list)
    # minimum per-graph lane width: 8 sublane rows x 128-lane groups
    w_min = _round_up(max(max_e, 1), SUBLANES * LANE_GROUP) // SUBLANES
    lane_tile = _choose_lane_tile(w_min, g8, target_tile_bytes)
    w = _round_up(w_min, ncores * lane_tile)
    e_cap = SUBLANES * w
    num_tiles = w // lane_tile

    def pack_channel(vals_list, pad_value):
        rows = []
        for vals in vals_list:
            pad = e_cap - int(vals.shape[0])
            full = jnp.concatenate([vals.astype(jnp.float32),
                                    jnp.full((pad,), pad_value, jnp.float32)])
            rows.append(full.reshape(SUBLANES, w))
        return jnp.concatenate(rows, axis=0)            # (G*8, w)

    # NOTE: for v5e byte-reduction, a_ij/zz could be packed as a bf16 pair in a
    # u32 channel (unpacked in-kernel with pltpu.bitcast); kept f32 for 1e-5 tol.
    slab = jnp.stack([pack_channel(a_ij_list, 1.0),      # a_ij pad: benign
                      pack_channel(r_list, r_pad),       # r pad: > r_cut
                      pack_channel(zzr_list, 0.0)],      # zz/r pad: 0 -> e = 0
                     axis=0)                             # (3, G*8, w)
    packed = jnp.transpose(slab.reshape(3, g8, num_tiles, lane_tile),
                           (2, 0, 1, 3))                 # (num_tiles, 3, G*8, lt)
    return packed


# ------------------------------- pallas_call wrapper ------------------------
def zbl_partial_sums(params, packed, *, ncores=1):
    num_tiles, nch, g8, lane_tile = packed.shape
    assert nch == 3 and g8 % SUBLANES == 0 and lane_tile % LANE_GROUP == 0
    assert num_tiles % ncores == 0
    tiles_per_core = num_tiles // ncores

    edge_spec = pl.BlockSpec(
        (1, 3, g8, lane_tile),
        lambda c, t: (c * tiles_per_core + t, 0, 0, 0))

    return pl.pallas_call(
        _zbl_kernel,
        out_shape=jax.ShapeDtypeStruct((ncores * g8, LANE_GROUP), jnp.float32),
        grid_spec=pltpu.PrefetchScalarGridSpec(
            num_scalar_prefetch=0,
            grid=(ncores, tiles_per_core),
            in_specs=[
                pl.BlockSpec(memory_space=pltpu.MemorySpace.SMEM),   # params
                edge_spec,                                           # fused edges
            ],
            out_specs=pl.BlockSpec((g8, LANE_GROUP), lambda c, t: (c, 0)),
        ),
        compiler_params=pltpu.CompilerParams(
            # ncores=1 on 1-TC v5e/v6e (trivial size-1 axis); on v7x pass
            # ncores=2 so CORE_PARALLEL actually shards across TensorCores.
            dimension_semantics=(
                pltpu.CORE_PARALLEL if ncores > 1 else pltpu.ARBITRARY,
                pltpu.ARBITRARY),
            vmem_limit_bytes=32 * 1024 * 1024),
    )(params, packed)


def zbl_energy(params, packed, num_graphs, half_ke, *, ncores=1):
    partial = zbl_partial_sums(params, packed, ncores=ncores)
    per_graph = partial.reshape(ncores, num_graphs, SUBLANES,
                                LANE_GROUP).sum(axis=(0, 2, 3))
    return half_ke * per_graph                              # (G,)


# --------------------------------- driver ----------------------------------
if __name__ == "__main__":
    key = jax.random.PRNGKey(0)

    r_cut = 5.0
    a0 = 0.5291772105638411
    ke = 14.399645351950548

    # Deterministic parameter init exactly as in NuclearRepulsion.__init__
    a_div_p = softplus_inverse(jnp.array([1.0 / (a0 * 0.8854)], jnp.float32))
    a_pow_p = softplus_inverse(jnp.array([0.23], jnp.float32))
    exponents_p = softplus_inverse(
        jnp.array([3.1998, 0.94229, 0.4029, 0.20162], jnp.float32))
    coefficients_p = softplus_inverse(
        jnp.array([0.18175, 0.50986, 0.28022, 0.02817], jnp.float32))

    # Forward-time parameter transforms (glue)
    a_pow_sp = softplus(a_pow_p)[0]
    a_div_sp = softplus(a_div_p)[0]
    exps_sp = softplus(exponents_p)                                  # (4,)
    coefs_sp = softplus(coefficients_p)
    coefs_norm = coefs_sp / jnp.maximum(jnp.sum(jnp.abs(coefs_sp)), 1e-12)

    # Synthetic batched graph (2 graphs) replacing dgl.DGLGraph bookkeeping.
    # TODO(synk): DGL graph construction / node_type lookup / edge-index gather
    # stay as host-side glue, as in the original module's data pipeline.
    element_types = ("H", "C", "O")
    atomic_numbers = {"H": 1.0, "C": 6.0, "O": 8.0}
    z_list = jnp.array([atomic_numbers[e] for e in element_types], jnp.float32)

    G = 2
    nodes_per_graph = [6, 5]
    edges_per_graph = [20, 14]

    k_nodes, k_edges = jax.random.split(key)
    a_ij_list, r_edge_list, zzr_list, raw_edges = [], [], [], []
    for g in range(G):
        n, ne = nodes_per_graph[g], edges_per_graph[g]
        node_type = jax.random.randint(
            jax.random.fold_in(k_nodes, g), (n,), 0, len(element_types))
        z = z_list[node_type]                       # z = z_list[node_type]
        ki, kj, kr = jax.random.split(jax.random.fold_in(k_edges, g), 3)
        idx_i = jax.random.randint(ki, (ne,), 0, n)
        idx_j = (idx_i + 1 + jax.random.randint(kj, (ne,), 0, n - 1)) % n
        r_ij = jax.random.uniform(
            kr, (ne,), minval=0.8, maxval=r_cut * 1.2).astype(jnp.float32)

        # Hoist z**softplus(a_pow) to per-node (N << E), gather to edges, and
        # fold 1/r into the zz channel in the same pass (no in-kernel divide).
        a_node = z ** a_pow_sp
        a_ij_list.append((a_node[idx_i] + a_node[idx_j]) * a_div_sp)
        r_edge_list.append(r_ij)
        zzr_list.append(z[idx_i] * z[idx_j] / r_ij)
        raw_edges.append((z[idx_i], z[idx_j], r_ij))

    packed = pack_edges(a_ij_list, r_edge_list, zzr_list,
                        r_pad=2.0 * r_cut, ncores=1)

    params = jnp.concatenate([
        jnp.array([1.0 / r_cut], jnp.float32),
        exps_sp.astype(jnp.float32),
        coefs_norm.astype(jnp.float32),
    ])

    energy = jax.block_until_ready(
        zbl_energy(params, packed, G, 0.5 * ke, ncores=1))

    # Pure-JAX reference (mirrors the PyTorch forward)
    def ref_graph_energy(zi, zj, rr):
        a_i = zi ** a_pow_sp
        a_j = zj ** a_pow_sp
        aij = (a_i + a_j) * a_div_sp
        screening = jnp.sum(
            coefs_norm[None, :]
            * jnp.exp(-aij[:, None] * exps_sp[None, :] * rr[:, None]),
            axis=1)
        x = rr / r_cut
        env = jnp.where(rr <= r_cut, 1 - 10 * x**3 + 15 * x**4 - 6 * x**5, 0.0)
        return 0.5 * ke * jnp.sum(zi * zj * env * screening / rr)

    ref = jnp.stack([ref_graph_energy(*raw_edges[g]) for g in range(G)])
    np.testing.assert_allclose(np.asarray(energy), np.asarray(ref),
                               rtol=1e-5, atol=1e-5)
    print("KERNEL_OK")
</pallas_src>

<mosaic_0001>
module attributes {stable_mosaic.version = 11 : i64} {
  func.func @_zbl_kernel(%arg0: i32, %arg1: i32, %arg2: memref<9xf32, #tpu.memory_space<smem>>, %arg3: memref<1x3x16x128xf32, #tpu.memory_space<vmem>>, %arg4: memref<16x128xf32, #tpu.memory_space<vmem>>) attributes {dimension_semantics = [#tpu.dimension_semantics<arbitrary>, #tpu.dimension_semantics<arbitrary>], iteration_bounds = array<i64: 1, 1>, scalar_prefetch = 0 : i64, scratch_operands = 0 : i64, tpu.core_type = #tpu.core_type<tc>, window_params = [{transform_indices = @transform_0, window_bounds = array<i64: 9>}, {transform_indices = @transform_1, window_bounds = array<i64: 1, 3, 16, 128>}, {transform_indices = @transform_2, window_bounds = array<i64: 16, 128>}]} {
    %c0_i32 = arith.constant 0 : i32
    %0 = arith.cmpi eq, %arg1, %c0_i32 : i32
    %1 = arith.extui %0 : i1 to i32
    %c0_i32_0 = arith.constant 0 : i32
    %2 = arith.cmpi ne, %1, %c0_i32_0 : i32
    scf.if %2 {
      %cst_26 = arith.constant 0.000000e+00 : f32
      %69 = vector.broadcast %cst_26 : f32 to vector<16x128xf32>
      %c0_27 = arith.constant 0 : index
      %c0_28 = arith.constant 0 : index
      %70 = vector.load %arg4[%c0_27, %c0_28] : memref<16x128xf32, #tpu.memory_space<vmem>>, vector<16x128xf32>
      tpu.vector_store %arg4[%c0_27, %c0_28], %69 {strides = array<i32>} : memref<16x128xf32, #tpu.memory_space<vmem>>, vector<16x128xf32>,
    } else {
    }
    %c0 = arith.constant 0 : index
    %c0_1 = arith.constant 0 : index
    %c0_2 = arith.constant 0 : index
    %c0_3 = arith.constant 0 : index
    %3 = vector.load %arg3[%c0, %c0_1, %c0_2, %c0_3] : memref<1x3x16x128xf32, #tpu.memory_space<vmem>>, vector<1x1x16x128xf32>
    %4 = vector.shape_cast %3 : vector<1x1x16x128xf32> to vector<16x128xf32>
    %c0_4 = arith.constant 0 : index
    %c1 = arith.constant 1 : index
    %c0_5 = arith.constant 0 : index
    %c0_6 = arith.constant 0 : index
    %5 = vector.load %arg3[%c0_4, %c1, %c0_5, %c0_6] : memref<1x3x16x128xf32, #tpu.memory_space<vmem>>, vector<1x1x16x128xf32>
    %6 = vector.shape_cast %5 : vector<1x1x16x128xf32> to vector<16x128xf32>
    %c0_7 = arith.constant 0 : index
    %c2 = arith.constant 2 : index
    %c0_8 = arith.constant 0 : index
    %c0_9 = arith.constant 0 : index
    %7 = vector.load %arg3[%c0_7, %c2, %c0_8, %c0_9] : memref<1x3x16x128xf32, #tpu.memory_space<vmem>>, vector<1x1x16x128xf32>
    %8 = vector.shape_cast %7 : vector<1x1x16x128xf32> to vector<16x128xf32>
    %9 = arith.mulf %4, %6 : vector<16x128xf32>
    %c5 = arith.constant 5 : index
    %10 = memref.load %arg2[%c5] : memref<9xf32, #tpu.memory_space<smem>>
    %c1_10 = arith.constant 1 : index
    %11 = memref.load %arg2[%c1_10] : memref<9xf32, #tpu.memory_space<smem>>
    %cst = arith.constant 0.000000e+00 : f32
    %12 = arith.subf %cst, %11 : f32
    %13 = vector.broadcast %12 : f32 to vector<16x128xf32>
    %14 = arith.mulf %13, %9 : vector<16x128xf32>
    %15 = math.exp %14 : vector<16x128xf32>
    %16 = vector.broadcast %10 : f32 to vector<16x128xf32>
    %17 = arith.mulf %16, %15 : vector<16x128xf32>
    %c6 = arith.constant 6 : index
    %18 = memref.load %arg2[%c6] : memref<9xf32, #tpu.memory_space<smem>>
    %c2_11 = arith.constant 2 : index
    %19 = memref.load %arg2[%c2_11] : memref<9xf32, #tpu.memory_space<smem>>
    %cst_12 = arith.constant 0.000000e+00 : f32
    %20 = arith.subf %cst_12, %19 : f32
    %21 = vector.broadcast %20 : f32 to vector<16x128xf32>
    %22 = arith.mulf %21, %9 : vector<16x128xf32>
    %23 = math.exp %22 : vector<16x128xf32>
    %24 = vector.broadcast %18 : f32 to vector<16x128xf32>
    %25 = arith.mulf %24, %23 : vector<16x128xf32>
    %26 = arith.addf %17, %25 : vector<16x128xf32>
    %c7 = arith.constant 7 : index
    %27 = memref.load %arg2[%c7] : memref<9xf32, #tpu.memory_space<smem>>
    %c3 = arith.constant 3 : index
    %28 = memref.load %arg2[%c3] : memref<9xf32, #tpu.memory_space<smem>>
    %cst_13 = arith.constant 0.000000e+00 : f32
    %29 = arith.subf %cst_13, %28 : f32
    %30 = vector.broadcast %29 : f32 to vector<16x128xf32>
    %31 = arith.mulf %30, %9 : vector<16x128xf32>
    %32 = math.exp %31 : vector<16x128xf32>
    %33 = vector.broadcast %27 : f32 to vector<16x128xf32>
    %34 = arith.mulf %33, %32 : vector<16x128xf32>
    %35 = arith.addf %26, %34 : vector<16x128xf32>
    %c8 = arith.constant 8 : index
    %36 = memref.load %arg2[%c8] : memref<9xf32, #tpu.memory_space<smem>>
    %c4 = arith.constant 4 : index
    %37 = memref.load %arg2[%c4] : memref<9xf32, #tpu.memory_space<smem>>
    %cst_14 = arith.constant 0.000000e+00 : f32
    %38 = arith.subf %cst_14, %37 : f32
    %39 = vector.broadcast %38 : f32 to vector<16x128xf32>
    %40 = arith.mulf %39, %9 : vector<16x128xf32>
    %41 = math.exp %40 : vector<16x128xf32>
    %42 = vector.broadcast %36 : f32 to vector<16x128xf32>
    %43 = arith.mulf %42, %41 : vector<16x128xf32>
    %44 = arith.addf %35, %43 : vector<16x128xf32>
    %c0_15 = arith.constant 0 : index
    %45 = memref.load %arg2[%c0_15] : memref<9xf32, #tpu.memory_space<smem>>
    %46 = vector.broadcast %45 : f32 to vector<16x128xf32>
    %47 = arith.mulf %6, %46 : vector<16x128xf32>
    %48 = arith.mulf %47, %47 : vector<16x128xf32>
    %49 = arith.mulf %48, %47 : vector<16x128xf32>
    %cst_16 = arith.constant 6.000000e+00 : f32
    %50 = vector.broadcast %cst_16 : f32 to vector<16x128xf32>
    %51 = arith.mulf %50, %47 : vector<16x128xf32>
    %cst_17 = arith.constant 1.500000e+01 : f32
    %52 = vector.broadcast %cst_17 : f32 to vector<16x128xf32>
    %53 = arith.subf %52, %51 : vector<16x128xf32>
    %54 = arith.mulf %47, %53 : vector<16x128xf32>
    %cst_18 = arith.constant -1.000000e+01 : f32
    %55 = vector.broadcast %cst_18 : f32 to vector<16x128xf32>
    %56 = arith.addf %55, %54 : vector<16x128xf32>
    %57 = arith.mulf %49, %56 : vector<16x128xf32>
    %cst_19 = arith.constant 1.000000e+00 : f32
    %58 = vector.broadcast %cst_19 : f32 to vector<16x128xf32>
    %59 = arith.addf %58, %57 : vector<16x128xf32>
    %cst_20 = arith.constant 1.000000e+00 : f32
    %60 = vector.broadcast %cst_20 : f32 to vector<16x128xf32>
    %61 = arith.cmpf ole, %47, %60 : vector<16x128xf32>
    %cst_21 = arith.constant 0.000000e+00 : f32
    %62 = vector.broadcast %cst_21 : f32 to vector<16x128xf32>
    %63 = arith.select %61, %59, %62 : vector<16x128xi1>, vector<16x128xf32>
    %64 = arith.mulf %8, %63 : vector<16x128xf32>
    %65 = arith.mulf %64, %44 : vector<16x128xf32>
    %c0_22 = arith.constant 0 : index
    %c0_23 = arith.constant 0 : index
    %66 = vector.load %arg4[%c0_22, %c0_23] : memref<16x128xf32, #tpu.memory_space<vmem>>, vector<16x128xf32>
    %67 = arith.addf %66, %65 : vector<16x128xf32>
    %c0_24 = arith.constant 0 : index
    %c0_25 = arith.constant 0 : index
    %68 = vector.load %arg4[%c0_24, %c0_25] : memref<16x128xf32, #tpu.memory_space<vmem>>, vector<16x128xf32>
    tpu.vector_store %arg4[%c0_24, %c0_25], %67 {strides = array<i32>} : memref<16x128xf32, #tpu.memory_space<vmem>>, vector<16x128xf32>,
    return
  }
  func.func @transform_0(%arg0: i32, %arg1: i32) -> i32 {
    %c0_i32 = arith.constant 0 : i32
    %c0_i32_0 = arith.constant 0 : i32
    return %c0_i32 : i32
  }
  func.func @transform_1(%arg0: i32, %arg1: i32) -> (i32, i32, i32, i32) {
    %c1_i32 = arith.constant 1 : i32
    %0 = arith.muli %arg0, %c1_i32 : i32
    %1 = arith.addi %0, %arg1 : i32
    %c0_i32 = arith.constant 0 : i32
    %c0_i32_0 = arith.constant 0 : i32
    %c0_i32_1 = arith.constant 0 : i32
    %c0_i32_2 = arith.constant 0 : i32
    return %1, %c0_i32, %c0_i32_0, %c0_i32_1 : i32, i32, i32, i32
  }
  func.func @transform_2(%arg0: i32, %arg1: i32) -> (i32, i32) {
    %c0_i32 = arith.constant 0 : i32
    %c0_i32_0 = arith.constant 0 : i32
    return %arg0, %c0_i32 : i32, i32
  }
}

</mosaic_0001>

<llo_original>
// kernel: tpu_custom_call.1
$region0: #{tpu_custom_call.1}
  #allocation0 [shape = 'u32[]', space=smem, size = 0x4, offset = 0x4, fixed_abs, tag = 'smem constant byte address 0x4 - core index']
  #allocation1 [shape = 'u32[72,128]{1,0:T(1,128)}', space=vmem, size = 0x9000, scoped, tag = 'internal scratch']
  %s0 = inlined_call_operand.hbm [shape: f32[9], index: 0, kind: input, shape index: {}]
  %s1 = inlined_call_operand.hbm [shape: f32[1,3,16,128], index: 1, kind: input, shape index: {}]
  %s2 = inlined_call_operand.hbm [shape: f32[16,128], index: 2, kind: output, shape index: {}]
  %s3 = sld [smem:[#allocation0]]
  $region30: #{tpu_custom_call.1} parent=0
    _
  %s5 = ssub.s32 1, %s3
  %s6 = scalar_select 0, %s5, %s3
  $region1: #{tpu_custom_call.1} parent=0
    #allocation2 [shape = 'u8[512]{0}', space=smem, size = 0x200, scoped, tag = 'input window, operand 0, single buffered']
    #allocation3 [shape = 's32[1]{0}', space=sflag, size = 0x4, scoped, tag = 'scoped memory for tpu_custom_call.1']
    #allocation4 [shape = 's32[1]{0}', space=sflag, size = 0x4, scoped, tag = 'scoped memory for tpu_custom_call.1']
    #allocation5 [shape = 's32[1]{0}', space=sflag, size = 0x4, scoped, tag = 'scoped memory for tpu_custom_call.1']
    #allocation6 [shape = 'u8[24576]{0}', space=vmem, size = 0x6000, scoped, tag = 'input window, operand 1, single buffered']
    #allocation7 [shape = 'u8[8192]{0}', space=vmem, size = 0x2000, scoped, tag = 'output window, operand 0, single buffered']
    %7 = vsyncpa [#allocation5], 0
    %8 = vsyncpa [#allocation3], 0
    %9 = vsyncpa [#allocation4], 0
    // Predicated region
    $region2: #{tpu_custom_call.1} parent=1 // pred_check
      _
    $region3: #{tpu_custom_call.1} parent=1 // pred_check_branch
      %11 = sbr.rel (0) target = $region5
    $region4: #{tpu_custom_call.1} parent=1 // pred_region
      %13 = vsyncadd [#allocation5], 0
      %s15 = sshll.u32 %s0, 4
      %s16 = int_to_ptr.hbm [resolvable:$true] %s15
      %18 = dma.hbm_to_smem %s16, 16, [#allocation2], [#allocation5]
    $region5: #{tpu_custom_call.1} parent=1 // pred_fallthru
      _
    // Predicated region
    $region6: #{tpu_custom_call.1} parent=1 // pred_check
      _
    $region7: #{tpu_custom_call.1} parent=1 // pred_check_branch
      %20 = sbr.rel (0) target = $region9
    $region8: #{tpu_custom_call.1} parent=1 // pred_region
      %s21 = sadd.s32 0, 0
      %23 = vsyncadd [#allocation3], 0
      %s24 = smul.addr %s21, 6
      %s25 = smul.addr %s24, 8
      %s26 = scalar_lea.hbm %s1, %s25
      %s27 = sshll.u32 %s26, 4
      %s28 = int_to_ptr.hbm [resolvable:$true] %s27
      %s29 = sshll.u32 [#allocation6], 4
      %s30 = int_to_ptr.vmem [resolvable:$true] %s29
      %35 = dma.hbm_to_vmem [thread:$0]  %s28, 768, %s30, [#allocation3], 128, 128, 8
    $region9: #{tpu_custom_call.1} parent=1 // pred_fallthru
      _
    // Predicated region
    $region10: #{tpu_custom_call.1} parent=1 // pred_check
      _
    $region11: #{tpu_custom_call.1} parent=1 // pred_check_branch
      %37 = sbr.rel (0) target = $region13
    $region12: #{tpu_custom_call.1} parent=1 // pred_region
      %39 = dma.done [#allocation5], 16
    $region13: #{tpu_custom_call.1} parent=1 // pred_fallthru
      _
    // Predicated region
    $region14: #{tpu_custom_call.1} parent=1 // pred_check
      _
    $region15: #{tpu_custom_call.1} parent=1 // pred_check_branch
      %41 = sbr.rel (0) target = $region17
    $region16: #{tpu_custom_call.1} parent=1 // pred_region
      %43 = dma.done [#allocation3], 768
    $region17: #{tpu_custom_call.1} parent=1 // pred_fallthru
      _
    %44 = sfence
    %s45 = sadd.s32 0, 0
    %p46 = scmp.eq.s32.totalorder 0, 0
    // Predicated region
    $region18: #{tpu_custom_call.1} parent=1 // pred_check
      %p47 = pneg %p46
    $region19: #{tpu_custom_call.1} parent=1 // pred_check_branch
      %49 = sbr.rel (%p47) target = $region21
    $region20: #{tpu_custom_call.1} parent=1 // pred_region
      %50 = vst [vmem:[#allocation7] sm:$0xff] 0.0
      %51 = vst [vmem:[#allocation7 + $0x8] sm:$0xff] 0.0
    $region21: #{tpu_custom_call.1} parent=1 // pred_fallthru
      _
    %v52 = vld [vmem:[#allocation6] sm:$0xff]
    %v53 = vld [vmem:[#allocation6 + $0x8] sm:$0xff]
    %s54 = scalar_lea.vmem [#allocation6], 16
    %v55 = vld [vmem:[%s54] sm:$0xff]
    %v56 = vld [vmem:[%s54 + $0x8] sm:$0xff]
    %s57 = scalar_lea.vmem [#allocation6], 32
    %v58 = vld [vmem:[%s57] sm:$0xff]
    %v59 = vld [vmem:[%s57 + $0x8] sm:$0xff]
    %v60 = vmul.f32 %v52, %v55
    %v61 = vmul.f32 %v53, %v56
    %s62 = sld [smem:[#allocation2 + $0x5]]
    %s63 = sld [smem:[#allocation2 + $0x1]]
    %s64 = ssub.f32 0.0, %s63
    %v65 = vstv %s64
    %v66 = vmul.f32 %v65, %v60
    %v67 = vmul.f32 %v65, %v61
    %v68 = vmul.f32 %v66, 1.442695
    %v69 = vpow.pop %v68
    %v70 = vmul.f32 %v67, 1.442695
    %v71 = vpow.pop %v70
    %v72 = vstv %s62
    %v73 = vmul.f32 %v72, %v69
    %v74 = vmul.f32 %v72, %v71
    %s75 = sld [smem:[#allocation2 + $0x6]]
    %s76 = sld [smem:[#allocation2 + $0x2]]
    %s77 = ssub.f32 0.0, %s76
    %v78 = vstv %s77
    %v79 = vmul.f32 %v78, %v60
    %v80 = vmul.f32 %v78, %v61
    %v81 = vmul.f32 %v79, 1.442695
    %v82 = vpow.pop %v81
    %v83 = vmul.f32 %v80, 1.442695
    %v84 = vpow.pop %v83
    %v85 = vstv %s75
    %v86 = vmul.f32 %v85, %v82
    %v87 = vmul.f32 %v85, %v84
    %v88 = vadd.f32 %v73, %v86
    %v89 = vadd.f32 %v74, %v87
    %s90 = sld [smem:[#allocation2 + $0x7]]
    %s91 = sld [smem:[#allocation2 + $0x3]]
    %s92 = ssub.f32 0.0, %s91
    %v93 = vstv %s92
    %v94 = vmul.f32 %v93, %v60
    %v95 = vmul.f32 %v93, %v61
    %v96 = vmul.f32 %v94, 1.442695
    %v97 = vpow.pop %v96
    %v98 = vmul.f32 %v95, 1.442695
    %v99 = vpow.pop %v98
    %v100 = vstv %s90
    %v101 = vmul.f32 %v100, %v97
    %v102 = vmul.f32 %v100, %v99
    %v103 = vadd.f32 %v88, %v101
    %v104 = vadd.f32 %v89, %v102
    %s105 = sld [smem:[#allocation2 + $0x8]]
    %s106 = sld [smem:[#allocation2 + $0x4]]
    %s107 = ssub.f32 0.0, %s106
    %v108 = vstv %s107
    %v109 = vmul.f32 %v108, %v60
    %v110 = vmul.f32 %v108, %v61
    %v111 = vmul.f32 %v109, 1.442695
    %v112 = vpow.pop %v111
    %v113 = vmul.f32 %v110, 1.442695
    %v114 = vpow.pop %v113
    %v115 = vstv %s105
    %v116 = vmul.f32 %v115, %v112
    %v117 = vmul.f32 %v115, %v114
    %v118 = vadd.f32 %v103, %v116
    %v119 = vadd.f32 %v104, %v117
    %s120 = sld [smem:[#allocation2]]
    %v121 = vstv %s120
    %v122 = vmul.f32 %v55, %v121
    %v123 = vmul.f32 %v56, %v121
    %v124 = vmul.f32 %v122, %v122
    %v125 = vmul.f32 %v123, %v123
    %v126 = vmul.f32 %v124, %v122
    %v127 = vmul.f32 %v125, %v123
    %v128 = vmul.f32 %v122, 6.0
    %v129 = vmul.f32 %v123, 6.0
    %v130 = vsub.f32 15.0, %v128
    %v131 = vsub.f32 15.0, %v129
    %v132 = vmul.f32 %v122, %v130
    %v133 = vmul.f32 %v123, %v131
    %v134 = vadd.f32 %v132, -10.0
    %v135 = vadd.f32 %v133, -10.0
    %v136 = vmul.f32 %v126, %v134
    %v137 = vmul.f32 %v127, %v135
    %v138 = vadd.f32 %v136, 1.0
    %v139 = vadd.f32 %v137, 1.0
    %vm140 = vcmp.le.f32.partialorder %v122, 1.0
    %vm141 = vcmp.le.f32.partialorder %v123, 1.0
    %v142 = vsel %vm140, %v138, 0.0
    %v143 = vsel %vm141, %v139, 0.0
    %v144 = vmul.f32 %v58, %v142
    %v145 = vmul.f32 %v59, %v143
    %v146 = vmul.f32 %v144, %v118
    %v147 = vmul.f32 %v145, %v119
    %v148 = vld [vmem:[#allocation7] sm:$0xff]
    %v149 = vld [vmem:[#allocation7 + $0x8] sm:$0xff]
    %v150 = vadd.f32 %v148, %v146
    %v151 = vadd.f32 %v149, %v147
    %152 = vst [vmem:[#allocation7] sm:$0xff] %v150
    %153 = vst [vmem:[#allocation7 + $0x8] sm:$0xff] %v151
    // Predicated region
    $region22: #{tpu_custom_call.1} parent=1 // pred_check
      _
    $region23: #{tpu_custom_call.1} parent=1 // pred_check_branch
      %155 = sbr.rel (0) target = $region25
    $region24: #{tpu_custom_call.1} parent=1 // pred_region
      %157 = vsyncadd [#allocation4], 0
      %s158 = sshll.u32 [#allocation7], 4
      %s159 = int_to_ptr.vmem [resolvable:$true] %s158
      %s160 = sshll.u32 %s2, 4
      %s161 = int_to_ptr.hbm [resolvable:$true] %s160
      %166 = dma.vmem_to_hbm [thread:$0]  %s159, 256, %s161, [#allocation4], 128, 128, 8
    $region25: #{tpu_custom_call.1} parent=1 // pred_fallthru
      _
    // Predicated region
    $region26: #{tpu_custom_call.1} parent=1 // pred_check
      _
    $region27: #{tpu_custom_call.1} parent=1 // pred_check_branch
      %168 = sbr.rel (0) target = $region29
    $region28: #{tpu_custom_call.1} parent=1 // pred_region
      %170 = dma.done [#allocation4], 256
    $region29: #{tpu_custom_call.1} parent=1 // pred_fallthru
      _
    %171 = vsyncpa [#allocation3], 1
    %172 = vsyncpa [#allocation4], 1
    %173 = vsyncpa [#allocation5], 1

</llo_original>
